<compile_context>
chip_gen: v6e
topology: v6e:2x2x1
jax: 0.10.0
libtpu: 0.0.40
codegen_flags: <defaults>
</compile_context>

<pallas_src>
import math

import numpy as np
import jax
import jax.numpy as jnp
from jax.experimental import pallas as pl
from jax.experimental.pallas import tpu as pltpu


# --------------------------------------------------------------------------
# small helpers
# --------------------------------------------------------------------------
def _round_up(x, m):
    return ((x + m - 1) // m) * m


def _pad_rows(x, rows):
    b = x.shape[0]
    if b == rows:
        return x
    pad = [(0, rows - b)] + [(0, 0)] * (x.ndim - 1)
    return jnp.pad(x, pad)


def _choose_batch_tile(B, block_b):
    """Batch tile: multiple of 16; full block_b for large B; for small B split
    into (at least) two tiles so v7x's two TensorCores both get work."""
    b16 = _round_up(B, 16)
    if b16 >= 2 * block_b:
        return block_b
    half = (b16 + 1) // 2
    return max(16, _round_up(half, 16))


def _choose_mmd_tile(n_pad, cap):
    """Largest multiple-of-16 tile <= cap that divides n_pad."""
    start = min(cap, n_pad)
    for tb in range(start, 15, -16):
        if n_pad % tb == 0:
            return tb
    return 16


def cosine_beta_schedule(timesteps, s=0.008):
    steps = timesteps + 1
    x = np.linspace(0, timesteps, steps, dtype=np.float64)
    alphas_cumprod = np.cos((x / timesteps + s) / (1 + s) * math.pi * 0.5) ** 2
    alphas_cumprod = alphas_cumprod / alphas_cumprod[0]
    betas = 1 - alphas_cumprod[1:] / alphas_cumprod[:-1]
    return np.clip(betas, 0, 0.999)


def sinusoidal_embedding(t, dim):
    half = dim // 2
    freqs = jnp.exp(-math.log(10000.0) * jnp.arange(half, dtype=jnp.float32) / half)
    args = t.astype(jnp.float32)[:, None] * freqs[None, :]
    return jnp.concatenate([jnp.sin(args), jnp.cos(args)], axis=-1)  # (B, dim)


# --------------------------------------------------------------------------
# Kernel 1: q_sample + conditional denoiser MLP + elementwise MSE
# --------------------------------------------------------------------------
def _make_denoise_loss_kernel(want_pred: bool):
    def kernel(ab_ref, x0_ref, noise_ref, temb_ref, lemb_ref,
               w1_ref, wt_ref, wl_ref, b1_ref, w2_ref, b2_ref, *out_refs):
        loss_ref = out_refs[0]

        ab = ab_ref[...]                       # (TB, 2) f32
        a = ab[:, 0:1]                         # sqrt(alphas_bar)[t]
        b = ab[:, 1:2]                         # sqrt(1 - alphas_bar)[t]
        noise = noise_ref[...]                 # (TB, D) f32

        # q_sample: x_t = sqrt(ab)*x0 + sqrt(1-ab)*noise (per-row broadcast)
        x_t = a * x0_ref[...] + b * noise

        # first layer: three accumulating MXU dots (no f32 concat copy),
        # bf16 operands, f32 accumulation.
        h = jnp.dot(x_t.astype(jnp.bfloat16), w1_ref[...],
                    preferred_element_type=jnp.float32)
        h = h + jnp.dot(temb_ref[...], wt_ref[...],
                        preferred_element_type=jnp.float32)
        h = h + jnp.dot(lemb_ref[...], wl_ref[...],
                        preferred_element_type=jnp.float32)
        h = jnp.maximum(h + b1_ref[...], 0.0)

        pred = jnp.dot(h.astype(jnp.bfloat16), w2_ref[...],
                       preferred_element_type=jnp.float32) + b2_ref[...]

        # element-wise MSE (reduction='none') in f32
        diff = pred - noise
        loss_ref[...] = diff * diff
        if want_pred:
            out_refs[1][...] = pred.astype(jnp.bfloat16)   # halves writeback

    return kernel


def _denoise_loss(ab, x0, noise, temb, lemb, w1, wt, wl, b1, w2, b2, *,
                  tile_b, want_pred):
    B_pad, D = x0.shape
    H = b1.shape[1]
    assert B_pad % tile_b == 0

    def row(width, dtype_unused=None):
        return pl.BlockSpec((tile_b, width), lambda i: (i, 0))

    def const(shape):
        # constant index_map -> weights stay resident in VMEM, never re-DMA'd
        return pl.BlockSpec(shape, lambda i: (0, 0))

    in_specs = [row(2), row(D), row(D), row(H), row(H),
                const(w1.shape), const(wt.shape), const(wl.shape),
                const(b1.shape), const(w2.shape), const(b2.shape)]
    out_specs = [row(D)]
    out_shape = [jax.ShapeDtypeStruct((B_pad, D), jnp.float32)]
    if want_pred:
        out_specs.append(row(D))
        out_shape.append(jax.ShapeDtypeStruct((B_pad, D), jnp.bfloat16))

    out = pl.pallas_call(
        _make_denoise_loss_kernel(want_pred),
        grid=(B_pad // tile_b,),
        in_specs=in_specs,
        out_specs=out_specs,
        out_shape=out_shape,
        compiler_params=pltpu.CompilerParams(
            dimension_semantics=("parallel",)),   # v7x: shard tiles over 2 TCs
    )(ab, x0, noise, temb, lemb, w1, wt, wl, b1, w2, b2)

    if want_pred:
        return out[0], out[1]
    return out[0], None


# --------------------------------------------------------------------------
# Kernel 2: blocked full-batch MMD(RBF) reduction -> three kernel sums
# --------------------------------------------------------------------------
def _make_mmd_kernel(gamma: float, tbm: int, n_valid: int, n_padded: int):
    gamma = float(gamma)
    need_mask = (n_valid != n_padded)
    cdims = (((1,), (1,)), ((), ()))   # A @ B^T (contract minor axes; no vxpose)

    def kernel(ri_ref, rj_ref, fi_ref, fj_ref, out_ref, acc_ref):
        i = pl.program_id(0)
        j = pl.program_id(1)

        @pl.when(jnp.logical_and(i == 0, j == 0))
        def _():
            acc_ref[0] = 0.0
            acc_ref[1] = 0.0
            acc_ref[2] = 0.0

        ri = ri_ref[...]                          # (tbm, D) f32  real rows (i)
        rj = rj_ref[...]                          # (tbm, D) f32  real rows (j)
        fi_b = fi_ref[...]                        # (tbm, D) bf16 fake rows (i)
        fj_b = fj_ref[...]                        # (tbm, D) bf16 fake rows (j)
        fi = fi_b.astype(jnp.float32)
        fj = fj_b.astype(jnp.float32)
        ri_b = ri.astype(jnp.bfloat16)
        rj_b = rj.astype(jnp.bfloat16)

        # squared row norms straight from the inputs (no Gram-diag trick);
        # column-shaped norms via a tiny ones-vector MXU dot (no transpose).
        ones_row = jnp.ones((1, ri.shape[-1]), jnp.float32)
        sq_ri = jnp.sum(ri * ri, axis=-1, keepdims=True)            # (tbm, 1)
        sq_fi = jnp.sum(fi * fi, axis=-1, keepdims=True)
        sq_rj = jax.lax.dot_general(ones_row, rj * rj, cdims,
                                    preferred_element_type=jnp.float32)  # (1, tbm)
        sq_fj = jax.lax.dot_general(ones_row, fj * fj, cdims,
                                    preferred_element_type=jnp.float32)

        # Gram blocks on the MXU in bf16, f32 accumulation
        rr = jax.lax.dot_general(ri_b, rj_b, cdims, preferred_element_type=jnp.float32)
        rf = jax.lax.dot_general(ri_b, fj_b, cdims, preferred_element_type=jnp.float32)
        ff = jax.lax.dot_general(fi_b, fj_b, cdims, preferred_element_type=jnp.float32)

        e_rr = jnp.exp(-gamma * jnp.maximum(sq_ri + sq_rj - 2.0 * rr, 0.0))
        e_rf = jnp.exp(-gamma * jnp.maximum(sq_ri + sq_fj - 2.0 * rf, 0.0))
        e_ff = jnp.exp(-gamma * jnp.maximum(sq_fi + sq_fj - 2.0 * ff, 0.0))

        if need_mask:
            gi = jax.lax.broadcasted_iota(jnp.int32, (tbm, tbm), 0) + i * tbm
            gj = jax.lax.broadcasted_iota(jnp.int32, (tbm, tbm), 1) + j * tbm
            m = ((gi < n_valid) & (gj < n_valid)).astype(jnp.float32)
            e_rr = e_rr * m
            e_rf = e_rf * m
            e_ff = e_ff * m

        acc_ref[0] = acc_ref[0] + jnp.sum(e_rr)
        acc_ref[1] = acc_ref[1] + jnp.sum(e_rf)
        acc_ref[2] = acc_ref[2] + jnp.sum(e_ff)

        @pl.when(jnp.logical_and(i == pl.num_programs(0) - 1,
                                 j == pl.num_programs(1) - 1))
        def _():
            out_ref[0] = acc_ref[0]
            out_ref[1] = acc_ref[1]
            out_ref[2] = acc_ref[2]

    return kernel


def _mmd_pallas(real_f32, fake_bf16, gamma, n_valid, block):
    """-log|MMD| between real (f32) and fake (bf16); rows >= n_valid masked."""
    n_pad, d = real_f32.shape
    tbm = _choose_mmd_tile(n_pad, block)
    nb = n_pad // tbm

    row_i = pl.BlockSpec((tbm, d), lambda i, j: (i, 0))
    row_j = pl.BlockSpec((tbm, d), lambda i, j: (j, 0))

    sums = pl.pallas_call(
        _make_mmd_kernel(gamma, tbm, n_valid, n_pad),
        grid=(nb, nb),
        in_specs=[row_i, row_j, row_i, row_j],
        out_specs=pl.BlockSpec(memory_space=pltpu.MemorySpace.SMEM),
        out_shape=jax.ShapeDtypeStruct((3,), jnp.float32),
        scratch_shapes=[pltpu.SMEM((3,), jnp.float32)],
        compiler_params=pltpu.CompilerParams(
            dimension_semantics=("arbitrary", "arbitrary")),
    )(real_f32, real_f32, fake_bf16, fake_bf16)

    br = jnp.float32(n_valid)
    bf = jnp.float32(n_valid)
    krr = sums[0] - br
    krf = sums[1]
    kff = sums[2] - bf
    mmd = (krr / (br * (br - 1.0)) - 2.0 * krf / (br * bf) + kff / (bf * (bf - 1.0)))
    return -jnp.log(jnp.abs(mmd))   # cheap scalar epilogue in plain JAX


# --------------------------------------------------------------------------
# Trainer wrapper (glue in plain JAX / numpy)
# --------------------------------------------------------------------------
class GaussianDiffusionTrainerPallas:
    """Pallas port of GaussianDiffusionTrainer with a synthetic denoiser."""

    def __init__(self, beta_1, beta_T, T, D, hidden, num_classes,
                 schedule_name='linear', loss_type='mse', mmd_gamma=1.0,
                 block_b=256, mmd_block_b=256):
        assert block_b % 16 == 0, "batch tile must be a multiple of 16 (bf16 sublane packing)"
        assert mmd_block_b % 16 == 0
        self.T = T
        self.loss_type = loss_type
        self.mmd_gamma = float(mmd_gamma)   # mmd_fn default gamma=1 in PyTorch
        self.block_b = block_b
        self.mmd_block_b = mmd_block_b
        self.hidden = hidden

        if schedule_name == 'linear':
            betas = np.linspace(beta_1, beta_T, T, dtype=np.float64)
        elif schedule_name == 'cosine':
            betas = cosine_beta_schedule(T, s=0.008)
        else:
            raise ValueError(schedule_name)
        alphas = 1.0 - betas
        alphas_bar = np.cumprod(alphas)
        # `extract` casts to float32 in the PyTorch code; do the same here.
        self.sqrt_alphas_bar = jnp.asarray(np.sqrt(alphas_bar), jnp.float32)
        self.sqrt_one_minus_alphas_bar = jnp.asarray(
            np.sqrt(1.0 - alphas_bar), jnp.float32)

        # TODO(synk): the real Diff-MTS denoiser (conditional UNet) is external
        # to this module; a deterministic conditional MLP stands in for
        # `self.model(x_t, t, labels)`.
        k = jax.random.PRNGKey(42)
        k1, k2, k3, k4, k5 = jax.random.split(k, 5)
        self.w1 = (jax.random.normal(k1, (D, hidden), jnp.float32)
                   / math.sqrt(D)).astype(jnp.bfloat16)
        self.wt = (jax.random.normal(k2, (hidden, hidden), jnp.float32)
                   / math.sqrt(hidden)).astype(jnp.bfloat16)
        self.wl = (jax.random.normal(k3, (hidden, hidden), jnp.float32)
                   / math.sqrt(hidden)).astype(jnp.bfloat16)
        self.b1 = jnp.zeros((1, hidden), jnp.float32)
        self.w2 = (jax.random.normal(k4, (hidden, D), jnp.float32)
                   / math.sqrt(hidden)).astype(jnp.bfloat16)
        self.b2 = jnp.zeros((1, D), jnp.float32)
        # label embedding stored in bf16 (only feeds the bf16 MXU)
        self.label_emb = jax.random.normal(
            k5, (num_classes, hidden), jnp.float32).astype(jnp.bfloat16)
        self.mmd_weight = jnp.float32(0.1)   # nn.Parameter(torch.tensor(0.1))

    def __call__(self, x_0, labels, key):
        B = x_0.shape[0]
        D = int(np.prod(x_0.shape[1:]))

        TB = _choose_batch_tile(B, self.block_b)
        B_pad = _round_up(B, TB)

        kt, kn = jax.random.split(key)
        # generate noise / t directly at B_pad rows -> no jnp.pad HBM round trip
        # on the big streams (only x0 and the tiny labels vector get padded).
        t = jax.random.randint(kt, (B_pad,), 0, self.T)
        noise = jax.random.normal(kn, (B_pad, D), jnp.float32)
        labels_pad = _pad_rows(labels, B_pad)

        # extract(v, t, x_shape): per-batch gather; packed as one (B_pad, 2)
        a = jnp.take(self.sqrt_alphas_bar, t)[:, None]
        b = jnp.take(self.sqrt_one_minus_alphas_bar, t)[:, None]
        ab = jnp.concatenate([a, b], axis=1)                       # (B_pad, 2)

        temb = sinusoidal_embedding(t, self.hidden).astype(jnp.bfloat16)
        lemb = jnp.take(self.label_emb, labels_pad, axis=0)        # (B_pad, H) bf16

        x0_flat = _pad_rows(x_0.reshape(B, -1).astype(jnp.float32), B_pad)

        use_mmd = (self.loss_type == 'mse+mmd')
        loss_flat, pred = _denoise_loss(
            ab, x0_flat, noise, temb, lemb,
            self.w1, self.wt, self.wl, self.b1, self.w2, self.b2,
            tile_b=TB, want_pred=use_mmd)

        if use_mmd:
            # feed the already-padded streams; the MMD kernel masks rows >= B
            mmd = _mmd_pallas(noise, pred, self.mmd_gamma, B, self.mmd_block_b)
            loss_flat = loss_flat + self.mmd_weight * mmd          # broadcast add

        loss = loss_flat[:B].reshape(x_0.shape)
        return loss, (ab, x0_flat, noise, temb, lemb)


# --------------------------------------------------------------------------
# pure-JAX references for sanity checks
# --------------------------------------------------------------------------
def _reference_denoise_loss(ab, x0, noise, temb, lemb, w1, wt, wl, b1, w2, b2):
    a = ab[:, 0:1]
    b = ab[:, 1:2]
    x_t = a * x0 + b * noise
    h = (jnp.dot(x_t.astype(jnp.bfloat16), w1, preferred_element_type=jnp.float32)
         + jnp.dot(temb, wt, preferred_element_type=jnp.float32)
         + jnp.dot(lemb, wl, preferred_element_type=jnp.float32))
    h = jnp.maximum(h + b1, 0.0)
    pred = jnp.dot(h.astype(jnp.bfloat16), w2,
                   preferred_element_type=jnp.float32) + b2
    return (pred - noise) ** 2, pred.astype(jnp.bfloat16)


def _reference_mmd(real_f32, fake_bf16, gamma):
    n = real_f32.shape[0]
    real_b = real_f32.astype(jnp.bfloat16)
    fake_f = fake_bf16.astype(jnp.float32)

    def d2(u32, ub, v32, vb):
        gram = jnp.dot(ub, vb.T, preferred_element_type=jnp.float32)
        su = jnp.sum(u32 * u32, -1, keepdims=True)
        sv = jnp.sum(v32 * v32, -1, keepdims=True)
        return jnp.maximum(su + sv.T - 2.0 * gram, 0.0)

    krr = jnp.sum(jnp.exp(-gamma * d2(real_f32, real_b, real_f32, real_b))) - n
    krf = jnp.sum(jnp.exp(-gamma * d2(real_f32, real_b, fake_f, fake_bf16)))
    kff = jnp.sum(jnp.exp(-gamma * d2(fake_f, fake_bf16, fake_f, fake_bf16))) - n
    mmd = (krr / (n * (n - 1)) - 2.0 * krf / (n * n) + kff / (n * (n - 1)))
    return -jnp.log(jnp.abs(mmd))


if __name__ == "__main__":
    C, L = 4, 32
    D = C * L                 # 128 -> lane-aligned output
    HIDDEN = 128
    T = 100
    NUM_CLASSES = 5

    key = jax.random.PRNGKey(0)
    k1, k2, k3, k4, k5, k6 = jax.random.split(key, 6)

    # --- case 1: plain MSE; B=32 -> tile 16, 2 parallel tiles ---------------
    B1 = 32
    tr1 = GaussianDiffusionTrainerPallas(
        beta_1=1e-4, beta_T=0.02, T=T, D=D, hidden=HIDDEN,
        num_classes=NUM_CLASSES, schedule_name='linear', loss_type='mse')
    x1 = jax.random.normal(k1, (B1, C, L), jnp.float32)
    y1 = jax.random.randint(k2, (B1,), 0, NUM_CLASSES)
    loss1, inter1 = tr1(x1, y1, k3)
    loss1 = jax.block_until_ready(loss1)
    assert loss1.shape == x1.shape and loss1.dtype == jnp.float32
    ref1, _ = _reference_denoise_loss(*inter1, tr1.w1, tr1.wt, tr1.wl,
                                      tr1.b1, tr1.w2, tr1.b2)
    np.testing.assert_allclose(np.asarray(loss1),
                               np.asarray(ref1[:B1]).reshape(x1.shape),
                               rtol=2e-2, atol=2e-3)

    # --- case 2: MSE + MMD; B=20 -> padded batch + masked MMD path ----------
    # gamma = 1/D instead of the PyTorch default 1.0: with D=128 the RBF
    # exp(-d2) underflows in f32 at gamma=1 and -log|mmd| is not meaningful.
    B2 = 20
    tr2 = GaussianDiffusionTrainerPallas(
        beta_1=1e-4, beta_T=0.02, T=T, D=D, hidden=HIDDEN,
        num_classes=NUM_CLASSES, schedule_name='cosine', loss_type='mse+mmd',
        mmd_gamma=1.0 / D)
    x2 = jax.random.normal(k4, (B2, C, L), jnp.float32)
    y2 = jax.random.randint(k5, (B2,), 0, NUM_CLASSES)
    loss2, inter2 = tr2(x2, y2, k6)
    loss2 = jax.block_until_ready(loss2)
    assert loss2.shape == x2.shape and loss2.dtype == jnp.float32
    ref_mse2, ref_pred2 = _reference_denoise_loss(
        *inter2, tr2.w1, tr2.wt, tr2.wl, tr2.b1, tr2.w2, tr2.b2)
    ref_mmd2 = _reference_mmd(inter2[2][:B2], ref_pred2[:B2], tr2.mmd_gamma)
    ref2 = ref_mse2[:B2] + tr2.mmd_weight * ref_mmd2
    np.testing.assert_allclose(np.asarray(loss2),
                               np.asarray(ref2).reshape(x2.shape),
                               rtol=2e-2, atol=2e-3)

    print("KERNEL_OK")
</pallas_src>

<mosaic_0001>
module attributes {stable_mosaic.version = 11 : i64} {
  func.func @kernel(%arg0: i32, %arg1: memref<16x2xf32, #tpu.memory_space<vmem>>, %arg2: memref<16x128xf32, #tpu.memory_space<vmem>>, %arg3: memref<16x128xf32, #tpu.memory_space<vmem>>, %arg4: memref<16x128xbf16, #tpu.memory_space<vmem>>, %arg5: memref<16x128xbf16, #tpu.memory_space<vmem>>, %arg6: memref<128x128xbf16, #tpu.memory_space<vmem>>, %arg7: memref<128x128xbf16, #tpu.memory_space<vmem>>, %arg8: memref<128x128xbf16, #tpu.memory_space<vmem>>, %arg9: memref<1x128xf32, #tpu.memory_space<vmem>>, %arg10: memref<128x128xbf16, #tpu.memory_space<vmem>>, %arg11: memref<1x128xf32, #tpu.memory_space<vmem>>, %arg12: memref<16x128xf32, #tpu.memory_space<vmem>>) attributes {dimension_semantics = [#tpu.dimension_semantics<parallel>], iteration_bounds = array<i64: 2>, scalar_prefetch = 0 : i64, scratch_operands = 0 : i64, tpu.core_type = #tpu.core_type<tc>, window_params = [{transform_indices = @transform_0, window_bounds = array<i64: 16, 2>}, {transform_indices = @transform_1, window_bounds = array<i64: 16, 128>}, {transform_indices = @transform_2, window_bounds = array<i64: 16, 128>}, {transform_indices = @transform_3, window_bounds = array<i64: 16, 128>}, {transform_indices = @transform_4, window_bounds = array<i64: 16, 128>}, {pipeline_mode = #tpu.pipeline_mode<synchronous>, transform_indices = @transform_5, window_bounds = array<i64: 128, 128>}, {pipeline_mode = #tpu.pipeline_mode<synchronous>, transform_indices = @transform_6, window_bounds = array<i64: 128, 128>}, {pipeline_mode = #tpu.pipeline_mode<synchronous>, transform_indices = @transform_7, window_bounds = array<i64: 128, 128>}, {pipeline_mode = #tpu.pipeline_mode<synchronous>, transform_indices = @transform_8, window_bounds = array<i64: 1, 128>}, {pipeline_mode = #tpu.pipeline_mode<synchronous>, transform_indices = @transform_9, window_bounds = array<i64: 128, 128>}, {pipeline_mode = #tpu.pipeline_mode<synchronous>, transform_indices = @transform_10, window_bounds = array<i64: 1, 128>}, {transform_indices = @transform_11, window_bounds = array<i64: 16, 128>}]} {
    %c0 = arith.constant 0 : index
    %c0_0 = arith.constant 0 : index
    %0 = vector.load %arg1[%c0, %c0_0] : memref<16x2xf32, #tpu.memory_space<vmem>>, vector<16x2xf32>
    %1 = vector.extract_strided_slice %0 {offsets = [0, 0], sizes = [16, 1], strides = [1, 1]} : vector<16x2xf32> to vector<16x1xf32>
    %2 = vector.extract_strided_slice %0 {offsets = [0, 1], sizes = [16, 1], strides = [1, 1]} : vector<16x2xf32> to vector<16x1xf32>
    %c0_1 = arith.constant 0 : index
    %c0_2 = arith.constant 0 : index
    %3 = vector.load %arg3[%c0_1, %c0_2] : memref<16x128xf32, #tpu.memory_space<vmem>>, vector<16x128xf32>
    %c0_3 = arith.constant 0 : index
    %c0_4 = arith.constant 0 : index
    %4 = vector.load %arg2[%c0_3, %c0_4] : memref<16x128xf32, #tpu.memory_space<vmem>>, vector<16x128xf32>
    %5 = vector.broadcast %1 : vector<16x1xf32> to vector<16x128xf32>
    %6 = arith.mulf %5, %4 : vector<16x128xf32>
    %7 = vector.broadcast %2 : vector<16x1xf32> to vector<16x128xf32>
    %8 = arith.mulf %7, %3 : vector<16x128xf32>
    %9 = arith.addf %6, %8 : vector<16x128xf32>
    %10 = arith.truncf %9 : vector<16x128xf32> to vector<16x128xbf16>
    %c0_5 = arith.constant 0 : index
    %c0_6 = arith.constant 0 : index
    %11 = vector.load %arg6[%c0_5, %c0_6] : memref<128x128xbf16, #tpu.memory_space<vmem>>, vector<128x128xbf16>
    %cst = arith.constant dense<0.000000e+00> : vector<16x128xf32>
    %12 = tpu.matmul %10, %11, %cst {dimension_numbers = #tpu.dot_dimension_numbers<[1], [0], [0], [1], [0, 0, 1, 1], [], []>} : vector<16x128xbf16>, vector<128x128xbf16>, vector<16x128xf32> -> vector<16x128xf32>
    %c0_7 = arith.constant 0 : index
    %c0_8 = arith.constant 0 : index
    %13 = vector.load %arg4[%c0_7, %c0_8] : memref<16x128xbf16, #tpu.memory_space<vmem>>, vector<16x128xbf16>
    %c0_9 = arith.constant 0 : index
    %c0_10 = arith.constant 0 : index
    %14 = vector.load %arg7[%c0_9, %c0_10] : memref<128x128xbf16, #tpu.memory_space<vmem>>, vector<128x128xbf16>
    %cst_11 = arith.constant dense<0.000000e+00> : vector<16x128xf32>
    %15 = tpu.matmul %13, %14, %cst_11 {dimension_numbers = #tpu.dot_dimension_numbers<[1], [0], [0], [1], [0, 0, 1, 1], [], []>} : vector<16x128xbf16>, vector<128x128xbf16>, vector<16x128xf32> -> vector<16x128xf32>
    %16 = arith.addf %12, %15 : vector<16x128xf32>
    %c0_12 = arith.constant 0 : index
    %c0_13 = arith.constant 0 : index
    %17 = vector.load %arg5[%c0_12, %c0_13] : memref<16x128xbf16, #tpu.memory_space<vmem>>, vector<16x128xbf16>
    %c0_14 = arith.constant 0 : index
    %c0_15 = arith.constant 0 : index
    %18 = vector.load %arg8[%c0_14, %c0_15] : memref<128x128xbf16, #tpu.memory_space<vmem>>, vector<128x128xbf16>
    %cst_16 = arith.constant dense<0.000000e+00> : vector<16x128xf32>
    %19 = tpu.matmul %17, %18, %cst_16 {dimension_numbers = #tpu.dot_dimension_numbers<[1], [0], [0], [1], [0, 0, 1, 1], [], []>} : vector<16x128xbf16>, vector<128x128xbf16>, vector<16x128xf32> -> vector<16x128xf32>
    %20 = arith.addf %16, %19 : vector<16x128xf32>
    %c0_17 = arith.constant 0 : index
    %c0_18 = arith.constant 0 : index
    %21 = vector.load %arg9[%c0_17, %c0_18] : memref<1x128xf32, #tpu.memory_space<vmem>>, vector<1x128xf32>
    %22 = vector.broadcast %21 : vector<1x128xf32> to vector<16x128xf32>
    %23 = arith.addf %20, %22 : vector<16x128xf32>
    %cst_19 = arith.constant 0.000000e+00 : f32
    %24 = vector.broadcast %cst_19 : f32 to vector<16x128xf32>
    %25 = arith.maximumf %23, %24 : vector<16x128xf32>
    %26 = arith.truncf %25 : vector<16x128xf32> to vector<16x128xbf16>
    %c0_20 = arith.constant 0 : index
    %c0_21 = arith.constant 0 : index
    %27 = vector.load %arg10[%c0_20, %c0_21] : memref<128x128xbf16, #tpu.memory_space<vmem>>, vector<128x128xbf16>
    %cst_22 = arith.constant dense<0.000000e+00> : vector<16x128xf32>
    %28 = tpu.matmul %26, %27, %cst_22 {dimension_numbers = #tpu.dot_dimension_numbers<[1], [0], [0], [1], [0, 0, 1, 1], [], []>} : vector<16x128xbf16>, vector<128x128xbf16>, vector<16x128xf32> -> vector<16x128xf32>
    %c0_23 = arith.constant 0 : index
    %c0_24 = arith.constant 0 : index
    %29 = vector.load %arg11[%c0_23, %c0_24] : memref<1x128xf32, #tpu.memory_space<vmem>>, vector<1x128xf32>
    %30 = vector.broadcast %29 : vector<1x128xf32> to vector<16x128xf32>
    %31 = arith.addf %28, %30 : vector<16x128xf32>
    %32 = arith.subf %31, %3 : vector<16x128xf32>
    %33 = arith.mulf %32, %32 : vector<16x128xf32>
    %c0_25 = arith.constant 0 : index
    %c0_26 = arith.constant 0 : index
    %34 = vector.load %arg12[%c0_25, %c0_26] : memref<16x128xf32, #tpu.memory_space<vmem>>, vector<16x128xf32>
    tpu.vector_store %arg12[%c0_25, %c0_26], %33 {strides = array<i32>} : memref<16x128xf32, #tpu.memory_space<vmem>>, vector<16x128xf32>,
    return
  }
  func.func @transform_0(%arg0: i32) -> (i32, i32) {
    %c0_i32 = arith.constant 0 : i32
    %c0_i32_0 = arith.constant 0 : i32
    return %arg0, %c0_i32 : i32, i32
  }
  func.func @transform_1(%arg0: i32) -> (i32, i32) {
    %c0_i32 = arith.constant 0 : i32
    %c0_i32_0 = arith.constant 0 : i32
    return %arg0, %c0_i32 : i32, i32
  }
  func.func @transform_2(%arg0: i32) -> (i32, i32) {
    %c0_i32 = arith.constant 0 : i32
    %c0_i32_0 = arith.constant 0 : i32
    return %arg0, %c0_i32 : i32, i32
  }
  func.func @transform_3(%arg0: i32) -> (i32, i32) {
    %c0_i32 = arith.constant 0 : i32
    %c0_i32_0 = arith.constant 0 : i32
    return %arg0, %c0_i32 : i32, i32
  }
  func.func @transform_4(%arg0: i32) -> (i32, i32) {
    %c0_i32 = arith.constant 0 : i32
    %c0_i32_0 = arith.constant 0 : i32
    return %arg0, %c0_i32 : i32, i32
  }
  func.func @transform_5(%arg0: i32) -> (i32, i32) {
    %c0_i32 = arith.constant 0 : i32
    %c0_i32_0 = arith.constant 0 : i32
    %c0_i32_1 = arith.constant 0 : i32
    return %c0_i32, %c0_i32_0 : i32, i32
  }
  func.func @transform_6(%arg0: i32) -> (i32, i32) {
    %c0_i32 = arith.constant 0 : i32
    %c0_i32_0 = arith.constant 0 : i32
    %c0_i32_1 = arith.constant 0 : i32
    return %c0_i32, %c0_i32_0 : i32, i32
  }
  func.func @transform_7(%arg0: i32) -> (i32, i32) {
    %c0_i32 = arith.constant 0 : i32
    %c0_i32_0 = arith.constant 0 : i32
    %c0_i32_1 = arith.constant 0 : i32
    return %c0_i32, %c0_i32_0 : i32, i32
  }
  func.func @transform_8(%arg0: i32) -> (i32, i32) {
    %c0_i32 = arith.constant 0 : i32
    %c0_i32_0 = arith.constant 0 : i32
    %c0_i32_1 = arith.constant 0 : i32
    return %c0_i32, %c0_i32_0 : i32, i32
  }
  func.func @transform_9(%arg0: i32) -> (i32, i32) {
    %c0_i32 = arith.constant 0 : i32
    %c0_i32_0 = arith.constant 0 : i32
    %c0_i32_1 = arith.constant 0 : i32
    return %c0_i32, %c0_i32_0 : i32, i32
  }
  func.func @transform_10(%arg0: i32) -> (i32, i32) {
    %c0_i32 = arith.constant 0 : i32
    %c0_i32_0 = arith.constant 0 : i32
    %c0_i32_1 = arith.constant 0 : i32
    return %c0_i32, %c0_i32_0 : i32, i32
  }
  func.func @transform_11(%arg0: i32) -> (i32, i32) {
    %c0_i32 = arith.constant 0 : i32
    %c0_i32_0 = arith.constant 0 : i32
    return %arg0, %c0_i32 : i32, i32
  }
}

</mosaic_0001>

<llo_original>
// kernel: tpu_custom_call.1
$region0: #{tpu_custom_call.1}
  #allocation0 [shape = 'u32[]', space=smem, size = 0x4, offset = 0x4, fixed_abs, tag = 'smem constant byte address 0x4 - core index']
  #allocation1 [shape = 'u32[144,128]{1,0:T(1,128)}', space=vmem, size = 0x12000, scoped, tag = 'internal scratch']
  %s0 = inlined_call_operand.vmem [shape: f32[32,2], index: 0, kind: input, shape index: {}]
  %s1 = inlined_call_operand.vmem [shape: f32[32,128], index: 1, kind: input, shape index: {}]
  %s2 = inlined_call_operand.hbm [shape: f32[32,128], index: 2, kind: input, shape index: {}]
  %s3 = inlined_call_operand.hbm [shape: bf16[32,128], index: 3, kind: input, shape index: {}]
  %s4 = inlined_call_operand.hbm [shape: bf16[32,128], index: 4, kind: input, shape index: {}]
  %s5 = inlined_call_operand.hbm [shape: bf16[128,128], index: 5, kind: input, shape index: {}]
  %s6 = inlined_call_operand.hbm [shape: bf16[128,128], index: 6, kind: input, shape index: {}]
  %s7 = inlined_call_operand.hbm [shape: bf16[128,128], index: 7, kind: input, shape index: {}]
  %s8 = inlined_call_operand.vmem [shape: f32[1,128], index: 8, kind: input, shape index: {}]
  %s9 = inlined_call_operand.hbm [shape: bf16[128,128], index: 9, kind: input, shape index: {}]
  %s10 = inlined_call_operand.vmem [shape: f32[1,128], index: 10, kind: input, shape index: {}]
  %s11 = inlined_call_operand.hbm [shape: f32[32,128], index: 11, kind: output, shape index: {}]
  %s12 = sld [smem:[#allocation0]]
  $region105: #{tpu_custom_call.1} parent=0
    _
  %s14 = ssub.s32 1, %s12
  %s15 = scalar_select 0, %s14, %s12
  $region1: #{tpu_custom_call.1} parent=0
    #allocation2 [shape = 'u8[16384]{0}', space=vmem, size = 0x4000, scoped, tag = 'input window, operand 2']
    #allocation3 [shape = 's32[2]{0}', space=sflag, size = 0x8, scoped, tag = 'scoped memory for tpu_custom_call.1']
    #allocation4 [shape = 's32[2]{0}', space=sflag, size = 0x8, scoped, tag = 'scoped memory for tpu_custom_call.1']
    #allocation5 [shape = 'u8[8192]{0}', space=vmem, size = 0x2000, scoped, tag = 'input window, operand 3']
    #allocation6 [shape = 's32[2]{0}', space=sflag, size = 0x8, scoped, tag = 'scoped memory for tpu_custom_call.1']
    #allocation7 [shape = 'u8[8192]{0}', space=vmem, size = 0x2000, scoped, tag = 'input window, operand 4']
    #allocation8 [shape = 'u8[32768]{0}', space=vmem, size = 0x8000, scoped, tag = 'input window, operand 5, single buffered']
    #allocation9 [shape = 's32[1]{0}', space=sflag, size = 0x4, scoped, tag = 'scoped memory for tpu_custom_call.1']
    #allocation10 [shape = 'u8[32768]{0}', space=vmem, size = 0x8000, scoped, tag = 'input window, operand 6, single buffered']
    #allocation11 [shape = 'u8[32768]{0}', space=vmem, size = 0x8000, scoped, tag = 'input window, operand 7, single buffered']
    #allocation12 [shape = 's32[1]{0}', space=sflag, size = 0x4, scoped, tag = 'scoped memory for tpu_custom_call.1']
    #allocation13 [shape = 'u8[32768]{0}', space=vmem, size = 0x8000, scoped, tag = 'input window, operand 9, single buffered']
    #allocation14 [shape = 'u8[16384]{0}', space=vmem, size = 0x4000, scoped, tag = 'output window, operand 0']
    %16 = vsyncpa [#allocation3], 0
    %s17 = scalar_lea.sflag [#allocation3], 1
    %18 = vsyncpa %s17, 0
    %19 = vsyncpa [#allocation6], 0
    %s20 = scalar_lea.sflag [#allocation6], 1
    %21 = vsyncpa %s20, 0
    %22 = vsyncpa [#allocation9], 0
    %23 = vsyncpa [#allocation12], 0
    %24 = vsyncpa [#allocation4], 0
    %s25 = scalar_lea.sflag [#allocation4], 1
    %26 = vsyncpa %s25, 0
    loop: start=0, step=1, limit=4
    $region2: #{tpu_custom_call.1} parent=1 // loop_pre_header
      _
    $region3: #{tpu_custom_call.1} parent=1 // loop_header
      %s28 = sphi 0, %s32
      %p29 = scmp.ge.s32.totalorder %s28, 4
      %s38 = sphi 0, %s40
      %s41 = sphi 0, %s38
      %s42 = sphi 0, %s41
      %s58 = sphi 0, %s42
      %s64 = sphi 0, %s66
      %s67 = sphi 0, %s64
      %s68 = sphi 0, %s67
      %s84 = sphi 0, %s68
      %s90 = sphi 0, %s92
      %s93 = sphi 0, %s90
      %s94 = sphi 0, %s93
      %s110 = sphi 0, %s94
      %s116 = sphi 0, %s118
      %s119 = sphi 0, %s116
      %s120 = sphi 0, %s119
      %s136 = sphi 0, %s120
      %s142 = sphi 0, %s144
      %s145 = sphi 0, %s142
      %s146 = sphi 0, %s145
      %s162 = sphi 0, %s146
      %s166 = sphi 0, %s166
      %s168 = sphi 0, %s166
      %s169 = sphi 0, %s168
      %s183 = sphi 0, %s169
      %s187 = sphi 0, %s187
      %s189 = sphi 0, %s187
      %s190 = sphi 0, %s189
      %s204 = sphi 0, %s190
      %s208 = sphi 0, %s208
      %s210 = sphi 0, %s208
      %s211 = sphi 0, %s210
      %s225 = sphi 0, %s211
      %s229 = sphi 0, %s229
      %s231 = sphi 0, %s229
      %s232 = sphi 0, %s231
      %s246 = sphi 0, %s232
      %s250 = sphi 0, %s250
      %s252 = sphi 0, %s250
      %s253 = sphi 0, %s252
      %s267 = sphi 0, %s253
      %s271 = sphi 0, %s271
      %s273 = sphi 0, %s271
      %s274 = sphi 0, %s273
      %s288 = sphi 0, %s274
      %s294 = sphi 0, %s296
      %s297 = sphi 0, %s294
      %s298 = sphi 0, %s297
      %s314 = sphi 0, %s298
    $region4: #{tpu_custom_call.1} parent=1 // loop_header_branch
      %31 = sbr.rel (%p29) target = $region8
    $region5: #{tpu_custom_call.1} parent=1 // loop_body
      %s33 = ssub.s32 %s28, 1
      %s34 = ssub.s32 %s28, 2
      %s35 = sadd.s32 %s28, 1
      %s36 = ssub.s32 %s28, %s35
      %p37 = scmp.eq.s32.totalorder %s36, 0
      %s39 = sadd.s32 %s38, 1
      %s40 = scalar_select %p37, %s38, %s39
      %p43 = pneg %p37
      %p44 = scmp.eq.s32.totalorder %s28, 1
      %p45 = por %p43, %p44
      %p46 = scmp.ne.s32.totalorder %s38, %s41
      %p47 = scmp.eq.s32.totalorder %s28, 0
      %p48 = por %p46, %p47
      %p49 = scmp.ne.s32.totalorder %s38, %s41
      %p50 = scmp.eq.s32.totalorder %s33, 1
      %p51 = por %p49, %p50
      %p52 = scmp.ne.s32.totalorder %s41, %s42
      %p53 = scmp.eq.s32.totalorder %s33, 0
      %p54 = por %p52, %p53
      %p55 = scmp.ne.s32.totalorder %s41, %s42
      %p56 = scmp.eq.s32.totalorder %s34, 1
      %p57 = por %p55, %p56
      %p59 = scmp.ne.s32.totalorder %s42, %s58
      %p60 = scmp.eq.s32.totalorder %s34, 0
      %p61 = por %p59, %p60
      %s62 = ssub.s32 %s28, %s35
      %p63 = scmp.eq.s32.totalorder %s62, 0
      %s65 = sadd.s32 %s64, 1
      %s66 = scalar_select %p63, %s64, %s65
      %p69 = pneg %p63
      %p70 = scmp.eq.s32.totalorder %s28, 1
      %p71 = por %p69, %p70
      %p72 = scmp.ne.s32.totalorder %s64, %s67
      %p73 = scmp.eq.s32.totalorder %s28, 0
      %p74 = por %p72, %p73
      %p75 = scmp.ne.s32.totalorder %s64, %s67
      %p76 = scmp.eq.s32.totalorder %s33, 1
      %p77 = por %p75, %p76
      %p78 = scmp.ne.s32.totalorder %s67, %s68
      %p79 = scmp.eq.s32.totalorder %s33, 0
      %p80 = por %p78, %p79
      %p81 = scmp.ne.s32.totalorder %s67, %s68
      %p82 = scmp.eq.s32.totalorder %s34, 1
      %p83 = por %p81, %p82
      %p85 = scmp.ne.s32.totalorder %s68, %s84
      %p86 = scmp.eq.s32.totalorder %s34, 0
      %p87 = por %p85, %p86
      %s88 = ssub.s32 %s28, %s35
      %p89 = scmp.eq.s32.totalorder %s88, 0
      %s91 = sadd.s32 %s90, 1
      %s92 = scalar_select %p89, %s90, %s91
      %p95 = pneg %p89
      %p96 = scmp.eq.s32.totalorder %s28, 1
      %p97 = por %p95, %p96
      %p98 = scmp.ne.s32.totalorder %s90, %s93
      %p99 = scmp.eq.s32.totalorder %s28, 0
      %p100 = por %p98, %p99
      %p101 = scmp.ne.s32.totalorder %s90, %s93
      %p102 = scmp.eq.s32.totalorder %s33, 1
      %p103 = por %p101, %p102
      %p104 = scmp.ne.s32.totalorder %s93, %s94
      %p105 = scmp.eq.s32.totalorder %s33, 0
      %p106 = por %p104, %p105
      %p107 = scmp.ne.s32.totalorder %s93, %s94
      %p108 = scmp.eq.s32.totalorder %s34, 1
      %p109 = por %p107, %p108
      %p111 = scmp.ne.s32.totalorder %s94, %s110
      %p112 = scmp.eq.s32.totalorder %s34, 0
      %p113 = por %p111, %p112
      %s114 = ssub.s32 %s28, %s35
      %p115 = scmp.eq.s32.totalorder %s114, 0
      %s117 = sadd.s32 %s116, 1
      %s118 = scalar_select %p115, %s116, %s117
      %p121 = pneg %p115
      %p122 = scmp.eq.s32.totalorder %s28, 1
      %p123 = por %p121, %p122
      %p124 = scmp.ne.s32.totalorder %s116, %s119
      %p125 = scmp.eq.s32.totalorder %s28, 0
      %p126 = por %p124, %p125
      %p127 = scmp.ne.s32.totalorder %s116, %s119
      %p128 = scmp.eq.s32.totalorder %s33, 1
      %p129 = por %p127, %p128
      %p130 = scmp.ne.s32.totalorder %s119, %s120
      %p131 = scmp.eq.s32.totalorder %s33, 0
      %p132 = por %p130, %p131
      %p133 = scmp.ne.s32.totalorder %s119, %s120
      %p134 = scmp.eq.s32.totalorder %s34, 1
      %p135 = por %p133, %p134
      %p137 = scmp.ne.s32.totalorder %s120, %s136
      %p138 = scmp.eq.s32.totalorder %s34, 0
      %p139 = por %p137, %p138
      %s140 = ssub.s32 %s28, %s35
      %p141 = scmp.eq.s32.totalorder %s140, 0
      %s143 = sadd.s32 %s142, 1
      %s144 = scalar_select %p141, %s142, %s143
      %p147 = pneg %p141
      %p148 = scmp.eq.s32.totalorder %s28, 1
      %p149 = por %p147, %p148
      %p150 = scmp.ne.s32.totalorder %s142, %s145
      %p151 = scmp.eq.s32.totalorder %s28, 0
      %p152 = por %p150, %p151
      %p153 = scmp.ne.s32.totalorder %s142, %s145
      %p154 = scmp.eq.s32.totalorder %s33, 1
      %p155 = por %p153, %p154
      %p156 = scmp.ne.s32.totalorder %s145, %s146
      %p157 = scmp.eq.s32.totalorder %s33, 0
      %p158 = por %p156, %p157
      %p159 = scmp.ne.s32.totalorder %s145, %s146
      %p160 = scmp.eq.s32.totalorder %s34, 1
      %p161 = por %p159, %p160
      %p163 = scmp.ne.s32.totalorder %s146, %s162
      %p164 = scmp.eq.s32.totalorder %s34, 0
      %p165 = por %p163, %p164
      %s167 = sadd.s32 %s166, 1
      %p170 = scmp.eq.s32.totalorder %s28, 1
      %p171 = scmp.ne.s32.totalorder %s166, %s168
      %p172 = scmp.eq.s32.totalorder %s28, 0
      %p173 = por %p171, %p172
      %p174 = scmp.ne.s32.totalorder %s166, %s168
      %p175 = scmp.eq.s32.totalorder %s33, 1
      %p176 = por %p174, %p175
      %p177 = scmp.ne.s32.totalorder %s168, %s169
      %p178 = scmp.eq.s32.totalorder %s33, 0
      %p179 = por %p177, %p178
      %p180 = scmp.ne.s32.totalorder %s168, %s169
      %p181 = scmp.eq.s32.totalorder %s34, 1
      %p182 = por %p180, %p181
      %p184 = scmp.ne.s32.totalorder %s169, %s183
      %p185 = scmp.eq.s32.totalorder %s34, 0
      %p186 = por %p184, %p185
      %s188 = sadd.s32 %s187, 1
      %p191 = scmp.eq.s32.totalorder %s28, 1
      %p192 = scmp.ne.s32.totalorder %s187, %s189
      %p193 = scmp.eq.s32.totalorder %s28, 0
      %p194 = por %p192, %p193
      %p195 = scmp.ne.s32.totalorder %s187, %s189
      %p196 = scmp.eq.s32.totalorder %s33, 1
      %p197 = por %p195, %p196
      %p198 = scmp.ne.s32.totalorder %s189, %s190
      %p199 = scmp.eq.s32.totalorder %s33, 0
      %p200 = por %p198, %p199
      %p201 = scmp.ne.s32.totalorder %s189, %s190
      %p202 = scmp.eq.s32.totalorder %s34, 1
      %p203 = por %p201, %p202
      %p205 = scmp.ne.s32.totalorder %s190, %s204
      %p206 = scmp.eq.s32.totalorder %s34, 0
      %p207 = por %p205, %p206
      %s209 = sadd.s32 %s208, 1
      %p212 = scmp.eq.s32.totalorder %s28, 1
      %p213 = scmp.ne.s32.totalorder %s208, %s210
      %p214 = scmp.eq.s32.totalorder %s28, 0
      %p215 = por %p213, %p214
      %p216 = scmp.ne.s32.totalorder %s208, %s210
      %p217 = scmp.eq.s32.totalorder %s33, 1
      %p218 = por %p216, %p217
      %p219 = scmp.ne.s32.totalorder %s210, %s211
      %p220 = scmp.eq.s32.totalorder %s33, 0
      %p221 = por %p219, %p220
      %p222 = scmp.ne.s32.totalorder %s210, %s211
      %p223 = scmp.eq.s32.totalorder %s34, 1
      %p224 = por %p222, %p223
      %p226 = scmp.ne.s32.totalorder %s211, %s225
      %p227 = scmp.eq.s32.totalorder %s34, 0
      %p228 = por %p226, %p227
      %s230 = sadd.s32 %s229, 1
      %p233 = scmp.eq.s32.totalorder %s28, 1
      %p234 = scmp.ne.s32.totalorder %s229, %s231
      %p235 = scmp.eq.s32.totalorder %s28, 0
      %p236 = por %p234, %p235
      %p237 = scmp.ne.s32.totalorder %s229, %s231
      %p238 = scmp.eq.s32.totalorder %s33, 1
      %p239 = por %p237, %p238
      %p240 = scmp.ne.s32.totalorder %s231, %s232
      %p241 = scmp.eq.s32.totalorder %s33, 0
      %p242 = por %p240, %p241
      %p243 = scmp.ne.s32.totalorder %s231, %s232
      %p244 = scmp.eq.s32.totalorder %s34, 1
      %p245 = por %p243, %p244
      %p247 = scmp.ne.s32.totalorder %s232, %s246
      %p248 = scmp.eq.s32.totalorder %s34, 0
      %p249 = por %p247, %p248
      %s251 = sadd.s32 %s250, 1
      %p254 = scmp.eq.s32.totalorder %s28, 1
      %p255 = scmp.ne.s32.totalorder %s250, %s252
      %p256 = scmp.eq.s32.totalorder %s28, 0
      %p257 = por %p255, %p256
      %p258 = scmp.ne.s32.totalorder %s250, %s252
      %p259 = scmp.eq.s32.totalorder %s33, 1
      %p260 = por %p258, %p259
      %p261 = scmp.ne.s32.totalorder %s252, %s253
      %p262 = scmp.eq.s32.totalorder %s33, 0
      %p263 = por %p261, %p262
      %p264 = scmp.ne.s32.totalorder %s252, %s253
      %p265 = scmp.eq.s32.totalorder %s34, 1
      %p266 = por %p264, %p265
      %p268 = scmp.ne.s32.totalorder %s253, %s267
      %p269 = scmp.eq.s32.totalorder %s34, 0
      %p270 = por %p268, %p269
      %s272 = sadd.s32 %s271, 1
      %p275 = scmp.eq.s32.totalorder %s28, 1
      %p276 = scmp.ne.s32.totalorder %s271, %s273
      %p277 = scmp.eq.s32.totalorder %s28, 0
      %p278 = por %p276, %p277
      %p279 = scmp.ne.s32.totalorder %s271, %s273
      %p280 = scmp.eq.s32.totalorder %s33, 1
      %p281 = por %p279, %p280
      %p282 = scmp.ne.s32.totalorder %s273, %s274
      %p283 = scmp.eq.s32.totalorder %s33, 0
      %p284 = por %p282, %p283
      %p285 = scmp.ne.s32.totalorder %s273, %s274
      %p286 = scmp.eq.s32.totalorder %s34, 1
      %p287 = por %p285, %p286
      %p289 = scmp.ne.s32.totalorder %s274, %s288
      %p290 = scmp.eq.s32.totalorder %s34, 0
      %p291 = por %p289, %p290
      %s292 = ssub.s32 %s28, %s35
      %p293 = scmp.eq.s32.totalorder %s292, 0
      %s295 = sadd.s32 %s294, 1
      %s296 = scalar_select %p293, %s294, %s295
      %p299 = pneg %p293
      %p300 = scmp.eq.s32.totalorder %s28, 1
      %p301 = por %p299, %p300
      %p302 = scmp.ne.s32.totalorder %s294, %s297
      %p303 = scmp.eq.s32.totalorder %s28, 0
      %p304 = por %p302, %p303
      %p305 = scmp.ne.s32.totalorder %s294, %s297
      %p306 = scmp.eq.s32.totalorder %s33, 1
      %p307 = por %p305, %p306
      %p308 = scmp.ne.s32.totalorder %s297, %s298
      %p309 = scmp.eq.s32.totalorder %s33, 0
      %p310 = por %p308, %p309
      %p311 = scmp.ne.s32.totalorder %s297, %s298
      %p312 = scmp.eq.s32.totalorder %s34, 1
      %p313 = por %p311, %p312
      %p315 = scmp.ne.s32.totalorder %s298, %s314
      %p316 = scmp.eq.s32.totalorder %s34, 0
      %p317 = por %p315, %p316
      %p318 = scmp.le.s32.totalorder 1, %s28
      %p319 = scmp.lt.s32.totalorder %s28, 3
      %p320 = pnand %p318, %p319
      %p321 = pneg %p320
      // Predicated region
      $region9: #{tpu_custom_call.1} parent=5 // pred_check
        _
      $region10: #{tpu_custom_call.1} parent=5 // pred_check_branch
        %323 = sbr.rel (%p320) target = $region12
      $region11: #{tpu_custom_call.1} parent=5 // pred_region
        %s324 = ssub.s32 %s28, 1
        // Predicated region
        $region13: #{tpu_custom_call.1} parent=11 // pred_check
          %p325 = pneg %p179
        $region14: #{tpu_custom_call.1} parent=11 // pred_check_branch
          %327 = sbr.rel (%p325) target = $region16
        $region15: #{tpu_custom_call.1} parent=11 // pred_region
          %s329 = ssub.s32 1024, 1024
          %330 = vsyncadd [#allocation9], %s329
          %s331 = sshll.u32 [#allocation8], 4
          %s332 = int_to_ptr.vmem [resolvable:$true] %s331
          %337 = dma.hbm_to_vmem [thread:$0]  %s5, 1024, %s332, [#allocation9], 64, 64, 4
        $region16: #{tpu_custom_call.1} parent=11 // pred_fallthru
          _
        // Predicated region
        $region17: #{tpu_custom_call.1} parent=11 // pred_check
          %p338 = pneg %p200
        $region18: #{tpu_custom_call.1} parent=11 // pred_check_branch
          %340 = sbr.rel (%p338) target = $region20
        $region19: #{tpu_custom_call.1} parent=11 // pred_region
          %s342 = ssub.s32 1024, 1024
          %343 = vsyncadd [#allocation9], %s342
          %s344 = sshll.u32 [#allocation10], 4
          %s345 = int_to_ptr.vmem [resolvable:$true] %s344
          %350 = dma.hbm_to_vmem [thread:$0]  %s6, 1024, %s345, [#allocation9], 64, 64, 4
        $region20: #{tpu_custom_call.1} parent=11 // pred_fallthru
          _
        // Predicated region
        $region21: #{tpu_custom_call.1} parent=11 // pred_check
          %p351 = pneg %p221
        $region22: #{tpu_custom_call.1} parent=11 // pred_check_branch
          %353 = sbr.rel (%p351) target = $region24
        $region23: #{tpu_custom_call.1} parent=11 // pred_region
          %s355 = ssub.s32 1024, 1024
          %356 = vsyncadd [#allocation12], %s355
          %s357 = sshll.u32 [#allocation11], 4
          %s358 = int_to_ptr.vmem [resolvable:$true] %s357
          %363 = dma.hbm_to_vmem [thread:$0]  %s7, 1024, %s358, [#allocation12], 64, 64, 4
        $region24: #{tpu_custom_call.1} parent=11 // pred_fallthru
          _
        // Predicated region
        $region25: #{tpu_custom_call.1} parent=11 // pred_check
          %p364 = pneg %p242
        $region26: #{tpu_custom_call.1} parent=11 // pred_check_branch
          %366 = sbr.rel (%p364) target = $region28
        $region27: #{tpu_custom_call.1} parent=11 // pred_region
          _
        $region28: #{tpu_custom_call.1} parent=11 // pred_fallthru
          _
        // Predicated region
        $region29: #{tpu_custom_call.1} parent=11 // pred_check
          %p367 = pneg %p263
        $region30: #{tpu_custom_call.1} parent=11 // pred_check_branch
          %369 = sbr.rel (%p367) target = $region32
        $region31: #{tpu_custom_call.1} parent=11 // pred_region
          %s371 = ssub.s32 1024, 1024
          %372 = vsyncadd [#allocation12], %s371
          %s373 = sshll.u32 [#allocation13], 4
          %s374 = int_to_ptr.vmem [resolvable:$true] %s373
          %379 = dma.hbm_to_vmem [thread:$0]  %s9, 1024, %s374, [#allocation12], 64, 64, 4
        $region32: #{tpu_custom_call.1} parent=11 // pred_fallthru
          _
        // Predicated region
        $region33: #{tpu_custom_call.1} parent=11 // pred_check
          %p380 = pneg %p284
        $region34: #{tpu_custom_call.1} parent=11 // pred_check_branch
          %382 = sbr.rel (%p380) target = $region36
        $region35: #{tpu_custom_call.1} parent=11 // pred_region
          _
        $region36: #{tpu_custom_call.1} parent=11 // pred_fallthru
          _
      $region12: #{tpu_custom_call.1} parent=5 // pred_fallthru
        _
      %p383 = scmp.lt.s32.totalorder %s28, 2
      // Predicated region
      $region37: #{tpu_custom_call.1} parent=5 // pred_check
        %p384 = pneg %p383
      $region38: #{tpu_custom_call.1} parent=5 // pred_check_branch
        %386 = sbr.rel (%p384) target = $region40
      $region39: #{tpu_custom_call.1} parent=5 // pred_region
        // Predicated region
        $region41: #{tpu_custom_call.1} parent=39 // pred_check
          %p387 = pneg %p48
        $region42: #{tpu_custom_call.1} parent=39 // pred_check_branch
          %389 = sbr.rel (%p387) target = $region44
        $region43: #{tpu_custom_call.1} parent=39 // pred_region
          %s390 = smul.u32 2, %s28
          %p391 = scmp.lt.s32.totalorder %s390, 3
          %s392 = scalar_select %p391, %s390, 3
          %s393 = smul.addr %s392, 8
          %s394 = scalar_lea.vmem %s0, %s393
          %s395 = smul.u32 2, %s28
        $region44: #{tpu_custom_call.1} parent=39 // pred_fallthru
          _
        // Predicated region
        $region45: #{tpu_custom_call.1} parent=39 // pred_check
          %p396 = pneg %p74
        $region46: #{tpu_custom_call.1} parent=39 // pred_check_branch
          %398 = sbr.rel (%p396) target = $region48
        $region47: #{tpu_custom_call.1} parent=39 // pred_region
          %s399 = smul.u32 2, %s28
          %p400 = scmp.lt.s32.totalorder %s399, 3
          %s401 = scalar_select %p400, %s399, 3
          %s402 = smul.addr %s401, 8
          %s403 = scalar_lea.vmem %s1, %s402
          %s404 = smul.u32 2, %s28
        $region48: #{tpu_custom_call.1} parent=39 // pred_fallthru
          _
        // Predicated region
        $region49: #{tpu_custom_call.1} parent=39 // pred_check
          %p405 = pneg %p100
        $region50: #{tpu_custom_call.1} parent=39 // pred_check_branch
          %407 = sbr.rel (%p405) target = $region52
        $region51: #{tpu_custom_call.1} parent=39 // pred_region
          %s408 = sand.u32 %s90, 1
          %s409 = scalar_lea.sflag [#allocation3], %s408
          %s410 = sand.u32 %s90, 1
          %s411 = smul.addr %s410, 16
          %s412 = scalar_lea.vmem [#allocation2], %s411
          %s413 = smul.u32 2, %s28
          %s415 = ssub.s32 256, 256
          %416 = vsyncadd %s409, %s415
          %s417 = smul.addr %s413, 128
          %s418 = scalar_lea.hbm %s2, %s417
          %s419 = sshll.u32 %s412, 4
          %s420 = int_to_ptr.vmem [resolvable:$true] %s419
          %425 = dma.hbm_to_vmem [thread:$0]  %s418, 256, %s420, %s409, 128, 128, 8
        $region52: #{tpu_custom_call.1} parent=39 // pred_fallthru
          _
        // Predicated region
        $region53: #{tpu_custom_call.1} parent=39 // pred_check
          %p426 = pneg %p126
        $region54: #{tpu_custom_call.1} parent=39 // pred_check_branch
          %428 = sbr.rel (%p426) target = $region56
        $region55: #{tpu_custom_call.1} parent=39 // pred_region
          %s429 = sand.u32 %s28, 1
          %s430 = scalar_lea.sflag [#allocation6], %s429
          %s431 = sand.u32 %s116, 1
          %s432 = smul.addr %s431, 8
          %s433 = scalar_lea.vmem [#allocation5], %s432
          %s434 = smul.u32 2, %s28
          %s436 = ssub.s32 128, 128
          %437 = vsyncadd %s430, %s436
          %s438 = smul.addr %s434, 64
          %s439 = scalar_lea.hbm %s3, %s438
          %s440 = sshll.u32 %s433, 4
          %s441 = int_to_ptr.vmem [resolvable:$true] %s440
          %446 = dma.hbm_to_vmem [thread:$0]  %s439, 128, %s441, %s430, 64, 64, 4
        $region56: #{tpu_custom_call.1} parent=39 // pred_fallthru
          _
        // Predicated region
        $region57: #{tpu_custom_call.1} parent=39 // pred_check
          %p447 = pneg %p152
        $region58: #{tpu_custom_call.1} parent=39 // pred_check_branch
          %449 = sbr.rel (%p447) target = $region60
        $region59: #{tpu_custom_call.1} parent=39 // pred_region
          %s450 = sand.u32 %s28, 1
          %s451 = scalar_lea.sflag [#allocation6], %s450
          %s452 = sand.u32 %s142, 1
          %s453 = smul.addr %s452, 8
          %s454 = scalar_lea.vmem [#allocation7], %s453
          %s455 = smul.u32 2, %s28
          %s457 = ssub.s32 128, 128
          %458 = vsyncadd %s451, %s457
          %s459 = smul.addr %s455, 64
          %s460 = scalar_lea.hbm %s4, %s459
          %s461 = sshll.u32 %s454, 4
          %s462 = int_to_ptr.vmem [resolvable:$true] %s461
          %467 = dma.hbm_to_vmem [thread:$0]  %s460, 128, %s462, %s451, 64, 64, 4
        $region60: #{tpu_custom_call.1} parent=39 // pred_fallthru
          _
      $region40: #{tpu_custom_call.1} parent=5 // pred_fallthru
        _
      %p468 = scmp.le.s32.totalorder 1, %s28
      %p469 = scmp.lt.s32.totalorder %s28, 3
      %p470 = pnand %p468, %p469
      %p471 = pneg %p470
      // Predicated region
      $region61: #{tpu_custom_call.1} parent=5 // pred_check
        _
      $region62: #{tpu_custom_call.1} parent=5 // pred_check_branch
        %473 = sbr.rel (%p470) target = $region64
      $region63: #{tpu_custom_call.1} parent=5 // pred_region
        %s474 = ssub.s32 %s28, 1
        %s475 = sand.u32 %s93, 1
        %s476 = scalar_lea.sflag [#allocation3], %s475
        %s477 = sand.u32 %s93, 1
        %s478 = smul.addr %s477, 16
        %s479 = scalar_lea.vmem [#allocation2], %s478
        // Predicated region
        $region65: #{tpu_custom_call.1} parent=63 // pred_check
          %p480 = pneg %p106
        $region66: #{tpu_custom_call.1} parent=63 // pred_check_branch
          %482 = sbr.rel (%p480) target = $region68
        $region67: #{tpu_custom_call.1} parent=63 // pred_region
          %483 = dma.done %s476, 256
        $region68: #{tpu_custom_call.1} parent=63 // pred_fallthru
          _
        %s484 = sand.u32 %s33, 1
        %s485 = scalar_lea.sflag [#allocation6], %s484
        %s486 = sand.u32 %s119, 1
        %s487 = smul.addr %s486, 8
        %s488 = scalar_lea.vmem [#allocation5], %s487
        // Predicated region
        $region69: #{tpu_custom_call.1} parent=63 // pred_check
          %p489 = pneg %p132
        $region70: #{tpu_custom_call.1} parent=63 // pred_check_branch
          %491 = sbr.rel (%p489) target = $region72
        $region71: #{tpu_custom_call.1} parent=63 // pred_region
          %492 = dma.done %s485, 128
        $region72: #{tpu_custom_call.1} parent=63 // pred_fallthru
          _
        %s493 = sand.u32 %s33, 1
        %s494 = scalar_lea.sflag [#allocation6], %s493
        %s495 = sand.u32 %s145, 1
        %s496 = smul.addr %s495, 8
        %s497 = scalar_lea.vmem [#allocation7], %s496
        // Predicated region
        $region73: #{tpu_custom_call.1} parent=63 // pred_check
          %p498 = pneg %p158
        $region74: #{tpu_custom_call.1} parent=63 // pred_check_branch
          %500 = sbr.rel (%p498) target = $region76
        $region75: #{tpu_custom_call.1} parent=63 // pred_region
          %501 = dma.done %s494, 128
        $region76: #{tpu_custom_call.1} parent=63 // pred_fallthru
          _
        // Predicated region
        $region77: #{tpu_custom_call.1} parent=63 // pred_check
          %p502 = pneg %p179
        $region78: #{tpu_custom_call.1} parent=63 // pred_check_branch
          %504 = sbr.rel (%p502) target = $region80
        $region79: #{tpu_custom_call.1} parent=63 // pred_region
          %505 = dma.done [#allocation9], 1024
        $region80: #{tpu_custom_call.1} parent=63 // pred_fallthru
          _
        // Predicated region
        $region81: #{tpu_custom_call.1} parent=63 // pred_check
          %p506 = pneg %p200
        $region82: #{tpu_custom_call.1} parent=63 // pred_check_branch
          %508 = sbr.rel (%p506) target = $region84
        $region83: #{tpu_custom_call.1} parent=63 // pred_region
          %509 = dma.done [#allocation9], 1024
        $region84: #{tpu_custom_call.1} parent=63 // pred_fallthru
          _
        // Predicated region
        $region85: #{tpu_custom_call.1} parent=63 // pred_check
          %p510 = pneg %p221
        $region86: #{tpu_custom_call.1} parent=63 // pred_check_branch
          %512 = sbr.rel (%p510) target = $region88
        $region87: #{tpu_custom_call.1} parent=63 // pred_region
          %513 = dma.done [#allocation12], 1024
        $region88: #{tpu_custom_call.1} parent=63 // pred_fallthru
          _
        // Predicated region
        $region89: #{tpu_custom_call.1} parent=63 // pred_check
          %p514 = pneg %p263
        $region90: #{tpu_custom_call.1} parent=63 // pred_check_branch
          %516 = sbr.rel (%p514) target = $region92
        $region91: #{tpu_custom_call.1} parent=63 // pred_region
          %517 = dma.done [#allocation12], 1024
        $region92: #{tpu_custom_call.1} parent=63 // pred_fallthru
          _
        %s518 = smul.u32 2, %s33
        %p519 = scmp.lt.s32.totalorder %s518, 3
        %s520 = scalar_select %p519, %s518, 3
        %s521 = smul.addr %s520, 8
        %s522 = scalar_lea.vmem %s0, %s521
        %p523 = pneg %p54
        %p524 = pneg %p51
        %s525 = smul.u32 2, %s33
        %p526 = scmp.lt.s32.totalorder %s525, 3
        %s527 = scalar_select %p526, %s525, 3
        %s528 = smul.addr %s527, 8
        %s529 = scalar_lea.vmem %s1, %s528
        %p530 = pneg %p80
        %p531 = pneg %p77
        %s532 = sand.u32 %s93, 1
        %s533 = scalar_lea.sflag [#allocation3], %s532
        %s534 = sand.u32 %s93, 1
        %s535 = smul.addr %s534, 16
        %s536 = scalar_lea.vmem [#allocation2], %s535
        %p537 = pneg %p106
        %p538 = pneg %p103
        %s539 = sand.u32 %s33, 1
        %s540 = scalar_lea.sflag [#allocation6], %s539
        %s541 = sand.u32 %s119, 1
        %s542 = smul.addr %s541, 8
        %s543 = scalar_lea.vmem [#allocation5], %s542
        %p544 = pneg %p132
        %p545 = pneg %p129
        %s546 = sand.u32 %s33, 1
        %s547 = scalar_lea.sflag [#allocation6], %s546
        %s548 = sand.u32 %s145, 1
        %s549 = smul.addr %s548, 8
        %s550 = scalar_lea.vmem [#allocation7], %s549
        %p551 = pneg %p158
        %p552 = pneg %p155
        %p553 = pneg %p179
        %p554 = pneg %p176
        %p555 = pneg %p200
        %p556 = pneg %p197
        %p557 = pneg %p221
        %p558 = pneg %p218
        %p559 = pneg %p242
        %p560 = pneg %p239
        %p561 = pneg %p263
        %p562 = pneg %p260
        %p563 = pneg %p284
        %p564 = pneg %p281
        %p565 = pneg %p310
        %p566 = pneg %p307
        %s567 = sand.u32 %s297, 1
        %s568 = scalar_lea.sflag [#allocation4], %s567
        %s569 = sand.u32 %s297, 1
        %s570 = smul.addr %s569, 16
        %s571 = scalar_lea.vmem [#allocation14], %s570
        %s572 = smul.u32 2, %s33
        %p573 = scmp.lt.s32.totalorder %s572, 3
        %s574 = scalar_select %p573, %s572, 3
        %s575 = smul.addr %s574, 8
        %s576 = scalar_lea.vmem %s0, %s575
        %s577 = smul.u32 2, %s33
        %s578 = smul.u32 2, %s33
        %p579 = scmp.lt.s32.totalorder %s578, 3
        %s580 = scalar_select %p579, %s578, 3
        %s581 = smul.addr %s580, 8
        %s582 = scalar_lea.vmem %s1, %s581
        %s583 = smul.u32 2, %s33
        %s584 = smul.u32 2, %s33
        %s585 = smul.u32 2, %s33
        %s586 = smul.u32 2, %s33
        %s587 = smul.u32 2, %s33
        %v589 = vld [vmem:[%s576] sm:$0xff]
        %v590 = vld [vmem:[%s576 + $0x8] sm:$0xff]
        %v591 = vld [vmem:[%s479] sm:$0xff]
        %v592 = vld [vmem:[%s479 + $0x8] sm:$0xff]
        %v593 = vld [vmem:[%s582] sm:$0xff]
        %v594 = vld [vmem:[%s582 + $0x8] sm:$0xff]
        %596 = vset.pattern.permute.xlu0 0
        %597 = vperm.xlu0 %596, %v589
        %v598 = vpop.permute.xlu0 %597
        %601 = vset.pattern.permute.xlu0 0
        %602 = vperm.xlu0 %601, %v590
        %v603 = vpop.permute.xlu0 %602
        %v605 = vmul.f32 %v598, %v593
        %v606 = vmul.f32 %v603, %v594
        %607 = vset.pattern.permute.xlu0 1
        %608 = vperm.xlu0 %607, %v589
        %v609 = vpop.permute.xlu0 %608
        %611 = vset.pattern.permute.xlu0 1
        %612 = vperm.xlu0 %611, %v590
        %v613 = vpop.permute.xlu0 %612
        %v615 = vmul.f32 %v609, %v591
        %v616 = vmul.f32 %v613, %v592
        %v617 = vadd.f32 %v605, %v615
        %v618 = vadd.f32 %v606, %v616
        %v619 = vpack.c.bf16 %v618, %v617
        %v620 = vld [vmem:[#allocation8] sm:$0xf]
        %v621 = vld [vmem:[#allocation8 + $0x4] sm:$0xf]
        %v622 = vld [vmem:[#allocation8 + $0x8] sm:$0xf]
        %v623 = vld [vmem:[#allocation8 + $0xc] sm:$0xf]
        %v624 = vld [vmem:[#allocation8 + $0x10] sm:$0xf]
        %v625 = vld [vmem:[#allocation8 + $0x14] sm:$0xf]
        %v626 = vld [vmem:[#allocation8 + $0x18] sm:$0xf]
        %v627 = vld [vmem:[#allocation8 + $0x1c] sm:$0xf]
        %v628 = vld [vmem:[#allocation8 + $0x20] sm:$0xf]
        %v629 = vld [vmem:[#allocation8 + $0x24] sm:$0xf]
        %v630 = vld [vmem:[#allocation8 + $0x28] sm:$0xf]
        %v631 = vld [vmem:[#allocation8 + $0x2c] sm:$0xf]
        %v632 = vld [vmem:[#allocation8 + $0x30] sm:$0xf]
        %v633 = vld [vmem:[#allocation8 + $0x34] sm:$0xf]
        %v634 = vld [vmem:[#allocation8 + $0x38] sm:$0xf]
        %v635 = vld [vmem:[#allocation8 + $0x3c] sm:$0xf]
        %v636 = vld [vmem:[%s488] sm:$0xf]
        %v637 = vld [vmem:[%s488 + $0x4] sm:$0xf]
        %v638 = vld [vmem:[#allocation10] sm:$0xf]
        %v639 = vld [vmem:[#allocation10 + $0x4] sm:$0xf]
        %v640 = vld [vmem:[#allocation10 + $0x8] sm:$0xf]
        %v641 = vld [vmem:[#allocation10 + $0xc] sm:$0xf]
        %v642 = vld [vmem:[#allocation10 + $0x10] sm:$0xf]
        %v643 = vld [vmem:[#allocation10 + $0x14] sm:$0xf]
        %v644 = vld [vmem:[#allocation10 + $0x18] sm:$0xf]
        %v645 = vld [vmem:[#allocation10 + $0x1c] sm:$0xf]
        %v646 = vld [vmem:[#allocation10 + $0x20] sm:$0xf]
        %v647 = vld [vmem:[#allocation10 + $0x24] sm:$0xf]
        %v648 = vld [vmem:[#allocation10 + $0x28] sm:$0xf]
        %v649 = vld [vmem:[#allocation10 + $0x2c] sm:$0xf]
        %v650 = vld [vmem:[#allocation10 + $0x30] sm:$0xf]
        %v651 = vld [vmem:[#allocation10 + $0x34] sm:$0xf]
        %v652 = vld [vmem:[#allocation10 + $0x38] sm:$0xf]
        %v653 = vld [vmem:[#allocation10 + $0x3c] sm:$0xf]
        %v656 = vunpack.c.l.b16 %v636
        %v657 = vunpack.c.l.b16 %v637
        %v658 = vpack.c.b16 %v657, %v656
        %v676 = vunpack.c.l.b16 %v638
        %v677 = vunpack.c.l.b16 %v639
        %v678 = vunpack.c.l.b16 %v640
        %v679 = vunpack.c.l.b16 %v641
        %v680 = vunpack.c.l.b16 %v642
        %v681 = vunpack.c.l.b16 %v643
        %v682 = vunpack.c.l.b16 %v644
        %v683 = vunpack.c.l.b16 %v645
        %v684 = vunpack.c.l.b16 %v646
        %v685 = vunpack.c.l.b16 %v647
        %v686 = vunpack.c.l.b16 %v648
        %v687 = vunpack.c.l.b16 %v649
        %v688 = vunpack.c.l.b16 %v650
        %v689 = vunpack.c.l.b16 %v651
        %v690 = vunpack.c.l.b16 %v652
        %v691 = vunpack.c.l.b16 %v653
        %v692 = vpack.c.b16 %v677, %v676
        %v693 = vpack.c.b16 %v679, %v678
        %v694 = vpack.c.b16 %v681, %v680
        %v695 = vpack.c.b16 %v683, %v682
        %v696 = vpack.c.b16 %v685, %v684
        %v697 = vpack.c.b16 %v687, %v686
        %v698 = vpack.c.b16 %v689, %v688
        %v699 = vpack.c.b16 %v691, %v690
        %708 = vmatprep.subr.bf16.mxu0 0
        %709 = vmatpush1.bf16.msra.mxu0 %v699
        %710 = vmatprep.subr.bf16.mxu0 0
        %711 = vmatpush1.bf16.msra.mxu0 %v698
        %712 = vmatprep.subr.bf16.mxu0 0
        %713 = vmatpush1.bf16.msra.mxu0 %v697
        %714 = vmatprep.subr.bf16.mxu0 0
        %715 = vmatpush1.bf16.msra.mxu0 %v696
        %716 = vmatprep.subr.bf16.mxu0 0
        %717 = vmatpush1.bf16.msra.mxu0 %v695
        %718 = vmatprep.subr.bf16.mxu0 0
        %719 = vmatpush1.bf16.msra.mxu0 %v694
        %720 = vmatprep.subr.bf16.mxu0 0
        %721 = vmatpush1.bf16.msra.mxu0 %v693
        %722 = vmatprep.subr.bf16.mxu0 0
        %723 = vmatpush1.bf16.msra.mxu0 %v692
        %724 = vmatprep.subr.bf16.mxu0 0
        %725 = vmatpush2.bf16.msra.mxu0 0
        %726 = vmatprep.subr.bf16.mxu0 0
        %727 = vmatpush2.bf16.msra.mxu0 0
        %728 = vmatprep.subr.bf16.mxu0 0
        %729 = vmatpush2.bf16.msra.mxu0 0
        %730 = vmatprep.subr.bf16.mxu0 0
        %731 = vmatpush2.bf16.msra.mxu0 0
        %732 = vmatprep.subr.bf16.mxu0 0
        %733 = vmatpush2.bf16.msra.mxu0 0
        %734 = vmatprep.subr.bf16.mxu0 0
        %735 = vmatpush2.bf16.msra.mxu0 0
        %736 = vmatprep.subr.bf16.mxu0 0
        %737 = vmatpush2.bf16.msra.mxu0 0
        %738 = vmatprep.subr.bf16.mxu0 0
        %739 = vmatpush2.bf16.msra.mxu0 0
        %740 = vmatprep.mubr.bf16.mxu0 0
        %741 = vmatmul.mubr.bf16.gmra.mxu0 %v658
        %v742 = vpop.f32.mrf.mxu0
        %v743 = vadd.f32 0.0, %v742
        %v744 = vpop.f32.mrf.mxu0
        %v745 = vpop.f32.mrf.mxu0
        %v746 = vadd.f32 0.0, %v745
        %v747 = vpop.f32.mrf.mxu0
        %748 = vdwg.mxu0
        %v765 = vunpack.c.l.b16 %v620
        %v766 = vunpack.c.l.b16 %v621
        %v767 = vunpack.c.l.b16 %v622
        %v768 = vunpack.c.l.b16 %v623
        %v769 = vunpack.c.l.b16 %v624
        %v770 = vunpack.c.l.b16 %v625
        %v771 = vunpack.c.l.b16 %v626
        %v772 = vunpack.c.l.b16 %v627
        %v773 = vunpack.c.l.b16 %v628
        %v774 = vunpack.c.l.b16 %v629
        %v775 = vunpack.c.l.b16 %v630
        %v776 = vunpack.c.l.b16 %v631
        %v777 = vunpack.c.l.b16 %v632
        %v778 = vunpack.c.l.b16 %v633
        %v779 = vunpack.c.l.b16 %v634
        %v780 = vunpack.c.l.b16 %v635
        %v781 = vpack.c.b16 %v766, %v765
        %v782 = vpack.c.b16 %v768, %v767
        %v783 = vpack.c.b16 %v770, %v769
        %v784 = vpack.c.b16 %v772, %v771
        %v785 = vpack.c.b16 %v774, %v773
        %v786 = vpack.c.b16 %v776, %v775
        %v787 = vpack.c.b16 %v778, %v777
        %v788 = vpack.c.b16 %v780, %v779
        %797 = vmatprep.subr.bf16.mxu0 0
        %798 = vmatpush1.bf16.msra.mxu0 %v788
        %799 = vmatprep.subr.bf16.mxu0 0
        %800 = vmatpush1.bf16.msra.mxu0 %v787
        %801 = vmatprep.subr.bf16.mxu0 0
        %802 = vmatpush1.bf16.msra.mxu0 %v786
        %803 = vmatprep.subr.bf16.mxu0 0
        %804 = vmatpush1.bf16.msra.mxu0 %v785
        %805 = vmatprep.subr.bf16.mxu0 0
        %806 = vmatpush1.bf16.msra.mxu0 %v784
        %807 = vmatprep.subr.bf16.mxu0 0
        %808 = vmatpush1.bf16.msra.mxu0 %v783
        %809 = vmatprep.subr.bf16.mxu0 0
        %810 = vmatpush1.bf16.msra.mxu0 %v782
        %811 = vmatprep.subr.bf16.mxu0 0
        %812 = vmatpush1.bf16.msra.mxu0 %v781
        %813 = vmatprep.subr.bf16.mxu0 0
        %814 = vmatpush2.bf16.msra.mxu0 0
        %815 = vmatprep.subr.bf16.mxu0 0
        %816 = vmatpush2.bf16.msra.mxu0 0
        %817 = vmatprep.subr.bf16.mxu0 0
        %818 = vmatpush2.bf16.msra.mxu0 0
        %819 = vmatprep.subr.bf16.mxu0 0
        %820 = vmatpush2.bf16.msra.mxu0 0
        %821 = vmatprep.subr.bf16.mxu0 0
        %822 = vmatpush2.bf16.msra.mxu0 0
        %823 = vmatprep.subr.bf16.mxu0 0
        %824 = vmatpush2.bf16.msra.mxu0 0
        %825 = vmatprep.subr.bf16.mxu0 0
        %826 = vmatpush2.bf16.msra.mxu0 0
        %827 = vmatprep.subr.bf16.mxu0 0
        %828 = vmatpush2.bf16.msra.mxu0 0
        %829 = vmatprep.mubr.bf16.mxu0 0
        %830 = vmatmul.mubr.bf16.gmra.mxu0 %v619
        %v831 = vpop.f32.mrf.mxu0
        %v832 = vadd.f32 %v743, %v831
        %v833 = vpop.f32.mrf.mxu0
        %v834 = vpop.f32.mrf.mxu0
        %v835 = vadd.f32 %v746, %v834
        %v836 = vpop.f32.mrf.mxu0
        %837 = vdwg.mxu0
        %v838 = vld [vmem:[%s497] sm:$0xf]
        %v839 = vld [vmem:[%s497 + $0x4] sm:$0xf]
        %v840 = vld [vmem:[#allocation11] sm:$0xf]
        %v841 = vld [vmem:[#allocation11 + $0x4] sm:$0xf]
        %v842 = vld [vmem:[#allocation11 + $0x8] sm:$0xf]
        %v843 = vld [vmem:[#allocation11 + $0xc] sm:$0xf]
        %v844 = vld [vmem:[#allocation11 + $0x10] sm:$0xf]
        %v845 = vld [vmem:[#allocation11 + $0x14] sm:$0xf]
        %v846 = vld [vmem:[#allocation11 + $0x18] sm:$0xf]
        %v847 = vld [vmem:[#allocation11 + $0x1c] sm:$0xf]
        %v848 = vld [vmem:[#allocation11 + $0x20] sm:$0xf]
        %v849 = vld [vmem:[#allocation11 + $0x24] sm:$0xf]
        %v850 = vld [vmem:[#allocation11 + $0x28] sm:$0xf]
        %v851 = vld [vmem:[#allocation11 + $0x2c] sm:$0xf]
        %v852 = vld [vmem:[#allocation11 + $0x30] sm:$0xf]
        %v853 = vld [vmem:[#allocation11 + $0x34] sm:$0xf]
        %v854 = vld [vmem:[#allocation11 + $0x38] sm:$0xf]
        %v855 = vld [vmem:[#allocation11 + $0x3c] sm:$0xf]
        %v858 = vunpack.c.l.b16 %v838
        %v859 = vunpack.c.l.b16 %v839
        %v860 = vpack.c.b16 %v859, %v858
        %v878 = vunpack.c.l.b16 %v840
        %v879 = vunpack.c.l.b16 %v841
        %v880 = vunpack.c.l.b16 %v842
        %v881 = vunpack.c.l.b16 %v843
        %v882 = vunpack.c.l.b16 %v844
        %v883 = vunpack.c.l.b16 %v845
        %v884 = vunpack.c.l.b16 %v846
        %v885 = vunpack.c.l.b16 %v847
        %v886 = vunpack.c.l.b16 %v848
        %v887 = vunpack.c.l.b16 %v849
        %v888 = vunpack.c.l.b16 %v850
        %v889 = vunpack.c.l.b16 %v851
        %v890 = vunpack.c.l.b16 %v852
        %v891 = vunpack.c.l.b16 %v853
        %v892 = vunpack.c.l.b16 %v854
        %v893 = vunpack.c.l.b16 %v855
        %v894 = vpack.c.b16 %v879, %v878
        %v895 = vpack.c.b16 %v881, %v880
        %v896 = vpack.c.b16 %v883, %v882
        %v897 = vpack.c.b16 %v885, %v884
        %v898 = vpack.c.b16 %v887, %v886
        %v899 = vpack.c.b16 %v889, %v888
        %v900 = vpack.c.b16 %v891, %v890
        %v901 = vpack.c.b16 %v893, %v892
        %910 = vmatprep.subr.bf16.mxu0 0
        %911 = vmatpush1.bf16.msra.mxu0 %v901
        %912 = vmatprep.subr.bf16.mxu0 0
        %913 = vmatpush1.bf16.msra.mxu0 %v900
        %914 = vmatprep.subr.bf16.mxu0 0
        %915 = vmatpush1.bf16.msra.mxu0 %v899
        %916 = vmatprep.subr.bf16.mxu0 0
        %917 = vmatpush1.bf16.msra.mxu0 %v898
        %918 = vmatprep.subr.bf16.mxu0 0
        %919 = vmatpush1.bf16.msra.mxu0 %v897
        %920 = vmatprep.subr.bf16.mxu0 0
        %921 = vmatpush1.bf16.msra.mxu0 %v896
        %922 = vmatprep.subr.bf16.mxu0 0
        %923 = vmatpush1.bf16.msra.mxu0 %v895
        %924 = vmatprep.subr.bf16.mxu0 0
        %925 = vmatpush1.bf16.msra.mxu0 %v894
        %926 = vmatprep.subr.bf16.mxu0 0
        %927 = vmatpush2.bf16.msra.mxu0 0
        %928 = vmatprep.subr.bf16.mxu0 0
        %929 = vmatpush2.bf16.msra.mxu0 0
        %930 = vmatprep.subr.bf16.mxu0 0
        %931 = vmatpush2.bf16.msra.mxu0 0
        %932 = vmatprep.subr.bf16.mxu0 0
        %933 = vmatpush2.bf16.msra.mxu0 0
        %934 = vmatprep.subr.bf16.mxu0 0
        %935 = vmatpush2.bf16.msra.mxu0 0
        %936 = vmatprep.subr.bf16.mxu0 0
        %937 = vmatpush2.bf16.msra.mxu0 0
        %938 = vmatprep.subr.bf16.mxu0 0
        %939 = vmatpush2.bf16.msra.mxu0 0
        %940 = vmatprep.subr.bf16.mxu0 0
        %941 = vmatpush2.bf16.msra.mxu0 0
        %942 = vmatprep.mubr.bf16.mxu0 0
        %943 = vmatmul.mubr.bf16.gmra.mxu0 %v860
        %v944 = vpop.f32.mrf.mxu0
        %v945 = vadd.f32 0.0, %v944
        %v946 = vpop.f32.mrf.mxu0
        %v947 = vpop.f32.mrf.mxu0
        %v948 = vadd.f32 0.0, %v947
        %v949 = vpop.f32.mrf.mxu0
        %950 = vdwg.mxu0
        %v951 = vadd.f32 %v832, %v945
        %v952 = vadd.f32 %v835, %v948
        %v953 = vld [vmem:[%s8] sm:$0x1]
        %v955 = vlaneseq
        %v956 = vshrl.u32 %v955, 7
        %v957 = vsub.s32 0, %v956
        %v958 = vrot.slane %v953, %v957
        %v960 = vadd.f32 %v951, %v958
        %v961 = vadd.f32 %v952, %v958
        %v962 = vmax.f32 %v960, 0.0
        %v963 = vmax.f32 %v961, 0.0
        %v964 = vpack.c.bf16 %v963, %v962
        %v965 = vld [vmem:[#allocation13] sm:$0xf]
        %v966 = vld [vmem:[#allocation13 + $0x4] sm:$0xf]
        %v967 = vld [vmem:[#allocation13 + $0x8] sm:$0xf]
        %v968 = vld [vmem:[#allocation13 + $0xc] sm:$0xf]
        %v969 = vld [vmem:[#allocation13 + $0x10] sm:$0xf]
        %v970 = vld [vmem:[#allocation13 + $0x14] sm:$0xf]
        %v971 = vld [vmem:[#allocation13 + $0x18] sm:$0xf]
        %v972 = vld [vmem:[#allocation13 + $0x1c] sm:$0xf]
        %v973 = vld [vmem:[#allocation13 + $0x20] sm:$0xf]
        %v974 = vld [vmem:[#allocation13 + $0x24] sm:$0xf]
        %v975 = vld [vmem:[#allocation13 + $0x28] sm:$0xf]
        %v976 = vld [vmem:[#allocation13 + $0x2c] sm:$0xf]
        %v977 = vld [vmem:[#allocation13 + $0x30] sm:$0xf]
        %v978 = vld [vmem:[#allocation13 + $0x34] sm:$0xf]
        %v979 = vld [vmem:[#allocation13 + $0x38] sm:$0xf]
        %v980 = vld [vmem:[#allocation13 + $0x3c] sm:$0xf]
        %v981 = vld [vmem:[%s10] sm:$0x1]
        %v983 = vlaneseq
        %v984 = vshrl.u32 %v983, 7
        %v985 = vsub.s32 0, %v984
        %v986 = vrot.slane %v981, %v985
        %v1004 = vunpack.c.l.b16 %v965
        %v1005 = vunpack.c.l.b16 %v966
        %v1006 = vunpack.c.l.b16 %v967
        %v1007 = vunpack.c.l.b16 %v968
        %v1008 = vunpack.c.l.b16 %v969
        %v1009 = vunpack.c.l.b16 %v970
        %v1010 = vunpack.c.l.b16 %v971
        %v1011 = vunpack.c.l.b16 %v972
        %v1012 = vunpack.c.l.b16 %v973
        %v1013 = vunpack.c.l.b16 %v974
        %v1014 = vunpack.c.l.b16 %v975
        %v1015 = vunpack.c.l.b16 %v976
        %v1016 = vunpack.c.l.b16 %v977
        %v1017 = vunpack.c.l.b16 %v978
        %v1018 = vunpack.c.l.b16 %v979
        %v1019 = vunpack.c.l.b16 %v980
        %v1020 = vpack.c.b16 %v1005, %v1004
        %v1021 = vpack.c.b16 %v1007, %v1006
        %v1022 = vpack.c.b16 %v1009, %v1008
        %v1023 = vpack.c.b16 %v1011, %v1010
        %v1024 = vpack.c.b16 %v1013, %v1012
        %v1025 = vpack.c.b16 %v1015, %v1014
        %v1026 = vpack.c.b16 %v1017, %v1016
        %v1027 = vpack.c.b16 %v1019, %v1018
        %1036 = vmatprep.subr.bf16.mxu0 0
        %1037 = vmatpush1.bf16.msra.mxu0 %v1027
        %1038 = vmatprep.subr.bf16.mxu0 0
        %1039 = vmatpush1.bf16.msra.mxu0 %v1026
        %1040 = vmatprep.subr.bf16.mxu0 0
        %1041 = vmatpush1.bf16.msra.mxu0 %v1025
        %1042 = vmatprep.subr.bf16.mxu0 0
        %1043 = vmatpush1.bf16.msra.mxu0 %v1024
        %1044 = vmatprep.subr.bf16.mxu0 0
        %1045 = vmatpush1.bf16.msra.mxu0 %v1023
        %1046 = vmatprep.subr.bf16.mxu0 0
        %1047 = vmatpush1.bf16.msra.mxu0 %v1022
        %1048 = vmatprep.subr.bf16.mxu0 0
        %1049 = vmatpush1.bf16.msra.mxu0 %v1021
        %1050 = vmatprep.subr.bf16.mxu0 0
        %1051 = vmatpush1.bf16.msra.mxu0 %v1020
        %1052 = vmatprep.subr.bf16.mxu0 0
        %1053 = vmatpush2.bf16.msra.mxu0 0
        %1054 = vmatprep.subr.bf16.mxu0 0
        %1055 = vmatpush2.bf16.msra.mxu0 0
        %1056 = vmatprep.subr.bf16.mxu0 0
        %1057 = vmatpush2.bf16.msra.mxu0 0
        %1058 = vmatprep.subr.bf16.mxu0 0
        %1059 = vmatpush2.bf16.msra.mxu0 0
        %1060 = vmatprep.subr.bf16.mxu0 0
        %1061 = vmatpush2.bf16.msra.mxu0 0
        %1062 = vmatprep.subr.bf16.mxu0 0
        %1063 = vmatpush2.bf16.msra.mxu0 0
        %1064 = vmatprep.subr.bf16.mxu0 0
        %1065 = vmatpush2.bf16.msra.mxu0 0
        %1066 = vmatprep.subr.bf16.mxu0 0
        %1067 = vmatpush2.bf16.msra.mxu0 0
        %1068 = vmatprep.mubr.bf16.mxu0 0
        %1069 = vmatmul.mubr.bf16.gmra.mxu0 %v964
        %v1070 = vpop.f32.mrf.mxu0
        %v1071 = vadd.f32 %v986, %v1070
        %v1072 = vpop.f32.mrf.mxu0
        %v1073 = vpop.f32.mrf.mxu0
        %v1074 = vadd.f32 %v986, %v1073
        %v1075 = vpop.f32.mrf.mxu0
        %1076 = vdwg.mxu0
        %v1077 = vsub.f32 %v1071, %v591
        %v1078 = vsub.f32 %v1074, %v592
        %v1079 = vmul.f32 %v1077, %v1077
        %v1080 = vmul.f32 %v1078, %v1078
        %1081 = vst [vmem:[%s571] sm:$0xff] %v1079
        %1082 = vst [vmem:[%s571 + $0x8] sm:$0xff] %v1080
        %s1083 = sand.u32 %s297, 1
        %s1084 = scalar_lea.sflag [#allocation4], %s1083
        %s1085 = sand.u32 %s297, 1
        %s1086 = smul.addr %s1085, 16
        %s1087 = scalar_lea.vmem [#allocation14], %s1086
        // Predicated region
        $region93: #{tpu_custom_call.1} parent=63 // pred_check
          %p1088 = pneg %p307
        $region94: #{tpu_custom_call.1} parent=63 // pred_check_branch
          %1090 = sbr.rel (%p1088) target = $region96
        $region95: #{tpu_custom_call.1} parent=63 // pred_region
          %s1091 = smul.u32 2, %s33
          %s1093 = ssub.s32 256, 256
          %1094 = vsyncadd %s1084, %s1093
          %s1095 = smul.addr %s1091, 128
          %s1096 = scalar_lea.hbm %s11, %s1095
          %s1097 = sshll.u32 %s1087, 4
          %s1098 = int_to_ptr.vmem [resolvable:$true] %s1097
          %1103 = dma.vmem_to_hbm [thread:$0]  %s1098, 256, %s1096, %s1084, 128, 128, 8
        $region96: #{tpu_custom_call.1} parent=63 // pred_fallthru
          _
      $region64: #{tpu_custom_call.1} parent=5 // pred_fallthru
        _
      %p1104 = scmp.le.s32.totalorder 2, %s28
      // Predicated region
      $region97: #{tpu_custom_call.1} parent=5 // pred_check
        %p1105 = pneg %p1104
      $region98: #{tpu_custom_call.1} parent=5 // pred_check_branch
        %1107 = sbr.rel (%p1105) target = $region100
      $region99: #{tpu_custom_call.1} parent=5 // pred_region
        %s1108 = ssub.s32 %s28, 2
        // Predicated region
        $region101: #{tpu_custom_call.1} parent=99 // pred_check
          %p1109 = pneg %p313
        $region102: #{tpu_custom_call.1} parent=99 // pred_check_branch
          %1111 = sbr.rel (%p1109) target = $region104
        $region103: #{tpu_custom_call.1} parent=99 // pred_region
          %s1112 = sand.u32 %s298, 1
          %s1113 = scalar_lea.sflag [#allocation4], %s1112
          %s1114 = sand.u32 %s298, 1
          %s1115 = smul.addr %s1114, 16
          %s1116 = scalar_lea.vmem [#allocation14], %s1115
          %1117 = dma.done %s1113, 256
        $region104: #{tpu_custom_call.1} parent=99 // pred_fallthru
          _
      $region100: #{tpu_custom_call.1} parent=5 // pred_fallthru
        _
    $region6: #{tpu_custom_call.1} parent=1 // loop_footer
      %s32 = sadd.s32 1, %s28
    $region7: #{tpu_custom_call.1} parent=1 // loop_footer_branch
      %27 = sbr.rel target = $region3
    $region8: #{tpu_custom_call.1} parent=1 // loop_exit
      _
    %1118 = vsyncpa [#allocation3], 1
    %s1119 = scalar_lea.sflag [#allocation3], 1
    %1120 = vsyncpa %s1119, 1
    %1121 = vsyncpa [#allocation6], 1
    %s1122 = scalar_lea.sflag [#allocation6], 1
    %1123 = vsyncpa %s1122, 1
    %1124 = vsyncpa [#allocation9], 1
    %1125 = vsyncpa [#allocation12], 1
    %1126 = vsyncpa [#allocation4], 1
    %s1127 = scalar_lea.sflag [#allocation4], 1
    %1128 = vsyncpa %s1127, 1

</llo_original>
